<compile_context>
chip_gen: v5e
topology: v5e:2x2
jax: 0.10.0
libtpu: 0.0.40
codegen_flags: <defaults>
</compile_context>

<pallas_src>
import functools

import jax
import jax.numpy as jnp
from jax.experimental import pallas as pl
from jax.experimental.pallas import tpu as pltpu


def _supcon_row_block_kernel(q_ref, qlab_ref, kT_ref, klab_ref, out_ref,
                             *, b_true):
    tq = q_ref.shape[0]
    bp = kT_ref.shape[1]

    q = q_ref[...]           # (tq, D)  compute dtype, pre-scaled by 1/T
    kT = kT_ref[...]         # (D, Bp)  compute dtype (pre-transposed keys)
    qlab = qlab_ref[...]     # (tq, 1)  int32 (or f32)
    klab = klab_ref[...]     # (1, Bp)  int32 (or f32)

    # Gram block on the MXU with f32 accumulation.  kT is pre-transposed in
    # the wrapper so this is a plain row-major matmul (no in-kernel relayout).
    adc = jax.lax.dot_general(
        q, kT, dimension_numbers=(((1,), (0,)), ((), ())),
        preferred_element_type=jnp.float32)                     # (tq, Bp)

    # Diagonal / padded-column predicate.  Only a (tq, 1) row-index column is
    # materialized; it broadcasts against the (tq, Bp) column iota.
    base = pl.program_id(0) * tq
    row_g = jax.lax.broadcasted_iota(jnp.int32, (tq, 1), 0) + base
    col_g = jax.lax.broadcasted_iota(jnp.int32, (tq, bp), 1)
    invalid = col_g == row_g                                    # self-pair
    if b_true != bp:                                            # static branch
        pad_col = col_g >= b_true
        invalid = jnp.logical_or(invalid, pad_col)
        adc_for_max = jnp.where(pad_col, jnp.float32(-1e30), adc)
    else:
        adc_for_max = adc

    pos_mask = jnp.logical_and(qlab == klab, jnp.logical_not(invalid))

    # Row-wise numerically stable log-sum-exp over valid (off-diagonal,
    # non-padded) columns.  Reference includes the diagonal in the max.
    logits_max = jnp.max(adc_for_max, axis=1, keepdims=True)    # (tq, 1)
    logits = adc - logits_max                                    # (tq, Bp)
    denom = jnp.sum(jnp.where(invalid, 0.0, jnp.exp(logits)),
                    axis=1, keepdims=True) + 1e-20               # (tq, 1)
    log_denom = jnp.log(denom)                                   # (tq, 1)

    mask_sum = jnp.sum(jnp.where(pos_mask, 1.0, 0.0),
                       axis=1, keepdims=True)                    # (tq, 1)
    single = jnp.where(mask_sum == 0.0, 1.0, 0.0)                # (tq, 1)

    # sum(mask * log_prob) == sum(mask * logits) - mask_sum * log(denom)
    masked_logit_sum = jnp.sum(jnp.where(pos_mask, logits, 0.0),
                               axis=1, keepdims=True)            # (tq, 1)
    mean_log_prob_pos = (masked_logit_sum - mask_sum * log_denom) / (
        mask_sum + single)
    loss = -mean_log_prob_pos * (1.0 - single)

    # One (tq, 2) store: column 0 = per-row loss, column 1 = "single" flag.
    is_loss_col = jax.lax.broadcasted_iota(jnp.int32, (tq, 2), 1) == 0
    out_ref[...] = jnp.where(is_loss_col, loss, single)


def _round_up(x, m):
    return ((x + m - 1) // m) * m


def _physical_vmem_bytes():
    try:
        return int(pltpu.get_tpu_info().vmem_capacity_bytes)
    except Exception:
        return 64 << 20              # conservative fallback (v7x per-core)


def _vmem_limit_bytes(tq, bp, d, compute_itemsize):
    # ~6 live (tq, Bp) f32 temporaries + double-buffered inputs/outputs + slack.
    tmp = 6 * tq * bp * 4
    io = 2 * ((tq * d + d * bp) * compute_itemsize + (tq + bp) * 4 + tq * 2 * 4)
    est = tmp + io + (2 << 20)
    cap = int(0.68 * _physical_vmem_bytes())   # generation-aware headroom
    return int(min(max(est, 32 << 20), cap))


def _choose_tiling(b, block_rows, align):
    """Row block (multiple of `align`) and padded batch size (multiple of it)."""
    if b <= block_rows:
        tq = _round_up(b, align)
        return tq, tq
    tq = max(align, (block_rows // align) * align)
    return tq, _round_up(b, tq)


def supcon_loss_clear(features, labels, temperature=0.07, *,
                      block_rows=None, use_bf16_matmul=True):
    """features: (B, D), labels: (B,) -> scalar float32 SupCon loss."""
    B, D = features.shape
    f = features.astype(jnp.float32)

    labels = labels.reshape(-1)
    if jnp.issubdtype(labels.dtype, jnp.floating):
        lab = labels.astype(jnp.float32)
    else:
        lab = labels.astype(jnp.int32)          # exact integer comparison

    compute_dtype = jnp.bfloat16 if use_bf16_matmul else jnp.float32
    itemsize = jnp.dtype(compute_dtype).itemsize
    # bf16 packs 16 rows per sublane tile; keep the row block aligned to it.
    align = 16 if use_bf16_matmul else 8
    if block_rows is None:
        # 256 fills the 256-wide MXU on v6e/v7x; fine on v5e given the
        # per-generation VMEM cap below.
        block_rows = 256
    tq, Bp = _choose_tiling(B, block_rows, align)

    pad = Bp - B
    if pad:
        f = jnp.pad(f, ((0, pad), (0, 0)))      # zero feature rows
        lab = jnp.pad(lab, (0, pad))            # pad labels are masked in-kernel

    # Pre-scale the query side by 1/temperature and pre-transpose the key side
    # ONCE in XLA; both are cast to the MXU compute dtype here so the kernel
    # never re-casts and the broadcast key matrix is stored at half width.
    q_mat = (f * jnp.float32(1.0 / float(temperature))).astype(compute_dtype)
    k_mat = jnp.transpose(f).astype(compute_dtype)      # (D, Bp)
    lab_col = lab.reshape(Bp, 1)
    lab_row = lab.reshape(1, Bp)

    grid = (Bp // tq,)
    kernel = functools.partial(_supcon_row_block_kernel, b_true=B)

    out = pl.pallas_call(
        kernel,
        out_shape=jax.ShapeDtypeStruct((Bp, 2), jnp.float32),
        grid=grid,
        in_specs=[
            pl.BlockSpec((tq, D), lambda i: (i, 0)),     # query rows (scaled)
            pl.BlockSpec((tq, 1), lambda i: (i, 0)),     # query labels
            pl.BlockSpec((D, Bp), lambda i: (0, 0)),     # keys^T (broadcast)
            pl.BlockSpec((1, Bp), lambda i: (0, 0)),     # key labels (broadcast)
        ],
        out_specs=pl.BlockSpec((tq, 2), lambda i: (i, 0)),
        compiler_params=pltpu.CompilerParams(
            dimension_semantics=("parallel",),            # rows split over TCs
            vmem_limit_bytes=_vmem_limit_bytes(tq, Bp, D, itemsize),
        ),
    )(q_mat, lab_col, k_mat, lab_row)

    # Tiny epilogue (B-element reductions) done in XLA; padded rows dropped.
    loss_vec = out[:B, 0]
    single = out[:B, 1]
    # Note: if every row is "single" this is 0/0, matching the reference.
    return jnp.sum(loss_vec) / (jnp.float32(B) - jnp.sum(single))


def _reference(features, labels, temperature=0.07):
    """Pure-JAX mirror of the PyTorch module (f32 throughout)."""
    B = features.shape[0]
    labels = labels.reshape(-1, 1)
    mask = (labels == labels.T).astype(jnp.float32)
    adc = (features @ features.T) / temperature
    logits = adc - jnp.max(adc, axis=1, keepdims=True)
    logits_mask = 1.0 - jnp.eye(B, dtype=jnp.float32)
    mask = mask * logits_mask
    single = (mask.sum(1) == 0).astype(jnp.float32)
    exp_logits = jnp.exp(logits) * logits_mask
    log_prob = logits - jnp.log(exp_logits.sum(1, keepdims=True) + 1e-20)
    mean_log_prob_pos = (mask * log_prob).sum(1) / (mask.sum(1) + single)
    loss = -mean_log_prob_pos * (1 - single)
    return loss.sum() / (B - single.sum())


if __name__ == "__main__":
    key = jax.random.PRNGKey(0)
    kf, kl = jax.random.split(key)
    B, D = 24, 32
    features = jax.random.normal(kf, (B, D), dtype=jnp.float32)
    features = features / jnp.linalg.norm(features, axis=1, keepdims=True)
    labels = jax.random.randint(kl, (B,), 0, 3)

    ref = _reference(features, labels, temperature=0.07)

    # f32 MXU path, multi-block grid, no padding (B divisible by the block).
    loss_f32 = supcon_loss_clear(features, labels, temperature=0.07,
                                 block_rows=8, use_bf16_matmul=False)
    jax.block_until_ready(loss_f32)
    assert jnp.allclose(loss_f32, ref, atol=3e-4, rtol=3e-4), (loss_f32, ref)

    # Default path: bf16 MXU, single padded block (B=24 -> Bp=32).
    loss_def = supcon_loss_clear(features, labels, temperature=0.07)
    jax.block_until_ready(loss_def)
    assert jnp.allclose(loss_def, ref, atol=2e-1, rtol=5e-2), (loss_def, ref)

    # bf16 MXU, multi-block grid + padded-column masking path.
    loss_bf16 = supcon_loss_clear(features, labels, temperature=0.07,
                                  block_rows=16)
    jax.block_until_ready(loss_bf16)
    assert jnp.allclose(loss_bf16, ref, atol=2e-1, rtol=5e-2), (loss_bf16, ref)

    print("KERNEL_OK")
</pallas_src>

<mosaic_0001>
module attributes {stable_mosaic.version = 11 : i64} {
  func.func @_supcon_row_block_kernel(%arg0: i32, %arg1: memref<8x32xf32, #tpu.memory_space<vmem>>, %arg2: memref<8x1xi32, #tpu.memory_space<vmem>>, %arg3: memref<32x24xf32, #tpu.memory_space<vmem>>, %arg4: memref<1x24xi32, #tpu.memory_space<vmem>>, %arg5: memref<8x2xf32, #tpu.memory_space<vmem>>) attributes {dimension_semantics = [#tpu.dimension_semantics<parallel>], iteration_bounds = array<i64: 3>, scalar_prefetch = 0 : i64, scratch_operands = 0 : i64, tpu.core_type = #tpu.core_type<tc>, window_params = [{transform_indices = @transform_0, window_bounds = array<i64: 8, 32>}, {transform_indices = @transform_1, window_bounds = array<i64: 8, 1>}, {pipeline_mode = #tpu.pipeline_mode<synchronous>, transform_indices = @transform_2, window_bounds = array<i64: 32, 24>}, {pipeline_mode = #tpu.pipeline_mode<synchronous>, transform_indices = @transform_3, window_bounds = array<i64: 1, 24>}, {transform_indices = @transform_4, window_bounds = array<i64: 8, 2>}]} {
    %c0 = arith.constant 0 : index
    %c0_0 = arith.constant 0 : index
    %0 = vector.load %arg1[%c0, %c0_0] : memref<8x32xf32, #tpu.memory_space<vmem>>, vector<8x32xf32>
    %c0_1 = arith.constant 0 : index
    %c0_2 = arith.constant 0 : index
    %1 = vector.load %arg3[%c0_1, %c0_2] : memref<32x24xf32, #tpu.memory_space<vmem>>, vector<32x24xf32>
    %c0_3 = arith.constant 0 : index
    %c0_4 = arith.constant 0 : index
    %2 = vector.load %arg2[%c0_3, %c0_4] : memref<8x1xi32, #tpu.memory_space<vmem>>, vector<8x1xi32>
    %c0_5 = arith.constant 0 : index
    %c0_6 = arith.constant 0 : index
    %3 = vector.load %arg4[%c0_5, %c0_6] : memref<1x24xi32, #tpu.memory_space<vmem>>, vector<1x24xi32>
    %cst = arith.constant dense<0.000000e+00> : vector<8x24xf32>
    %4 = tpu.matmul %0, %1, %cst {dimension_numbers = #tpu.dot_dimension_numbers<[1], [0], [0], [1], [0, 0, 1, 1], [], []>} : vector<8x32xf32>, vector<32x24xf32>, vector<8x24xf32> -> vector<8x24xf32>
    %c8_i32 = arith.constant 8 : i32
    %5 = arith.muli %arg0, %c8_i32 : i32
    %6 = tpu.iota {dimensions = array<i32: 0>} : vector<8x1xi32>
    %7 = vector.broadcast %5 : i32 to vector<8x1xi32>
    %8 = arith.addi %6, %7 : vector<8x1xi32>
    %9 = tpu.iota {dimensions = array<i32: 1>} : vector<8x24xi32>
    %10 = vector.broadcast %8 : vector<8x1xi32> to vector<8x24xi32>
    %11 = arith.cmpi eq, %9, %10 : vector<8x24xi32>
    %12 = vector.broadcast %2 : vector<8x1xi32> to vector<8x24xi32>
    %13 = vector.broadcast %3 : vector<1x24xi32> to vector<8x24xi32>
    %14 = arith.cmpi eq, %12, %13 : vector<8x24xi32>
    %cst_7 = arith.constant dense<true> : vector<8x24xi1>
    %15 = arith.xori %11, %cst_7 : vector<8x24xi1>
    %16 = arith.andi %14, %15 : vector<8x24xi1>
    %cst_8 = arith.constant dense<0xFF800000> : vector<8xf32>
    %17 = vector.multi_reduction <maximumf>, %4, %cst_8 [1] : vector<8x24xf32> to vector<8xf32>
    %18 = vector.shape_cast %17 : vector<8xf32> to vector<8x1xf32>
    %19 = vector.broadcast %18 : vector<8x1xf32> to vector<8x24xf32>
    %20 = arith.subf %4, %19 : vector<8x24xf32>
    %21 = math.exp %20 : vector<8x24xf32>
    %cst_9 = arith.constant 0.000000e+00 : f32
    %22 = vector.broadcast %cst_9 : f32 to vector<8x24xf32>
    %23 = arith.select %11, %22, %21 : vector<8x24xi1>, vector<8x24xf32>
    %cst_10 = arith.constant dense<0.000000e+00> : vector<8xf32>
    %24 = vector.multi_reduction <add>, %23, %cst_10 [1] : vector<8x24xf32> to vector<8xf32>
    %25 = vector.shape_cast %24 : vector<8xf32> to vector<8x1xf32>
    %cst_11 = arith.constant 9.99999968E-21 : f32
    %26 = vector.broadcast %cst_11 : f32 to vector<8x1xf32>
    %27 = arith.addf %25, %26 : vector<8x1xf32>
    %28 = math.log %27 : vector<8x1xf32>
    %cst_12 = arith.constant 1.000000e+00 : f32
    %cst_13 = arith.constant 0.000000e+00 : f32
    %29 = vector.broadcast %cst_12 : f32 to vector<8x24xf32>
    %30 = vector.broadcast %cst_13 : f32 to vector<8x24xf32>
    %31 = arith.select %16, %29, %30 : vector<8x24xi1>, vector<8x24xf32>
    %cst_14 = arith.constant dense<0.000000e+00> : vector<8xf32>
    %32 = vector.multi_reduction <add>, %31, %cst_14 [1] : vector<8x24xf32> to vector<8xf32>
    %33 = vector.shape_cast %32 : vector<8xf32> to vector<8x1xf32>
    %cst_15 = arith.constant 0.000000e+00 : f32
    %34 = vector.broadcast %cst_15 : f32 to vector<8x1xf32>
    %35 = arith.cmpf oeq, %33, %34 : vector<8x1xf32>
    %cst_16 = arith.constant 1.000000e+00 : f32
    %cst_17 = arith.constant 0.000000e+00 : f32
    %36 = vector.broadcast %cst_16 : f32 to vector<8x1xf32>
    %37 = vector.broadcast %cst_17 : f32 to vector<8x1xf32>
    %38 = arith.select %35, %36, %37 : vector<8x1xi1>, vector<8x1xf32>
    %cst_18 = arith.constant 0.000000e+00 : f32
    %39 = vector.broadcast %cst_18 : f32 to vector<8x24xf32>
    %40 = arith.select %16, %20, %39 : vector<8x24xi1>, vector<8x24xf32>
    %cst_19 = arith.constant dense<0.000000e+00> : vector<8xf32>
    %41 = vector.multi_reduction <add>, %40, %cst_19 [1] : vector<8x24xf32> to vector<8xf32>
    %42 = vector.shape_cast %41 : vector<8xf32> to vector<8x1xf32>
    %43 = arith.mulf %33, %28 : vector<8x1xf32>
    %44 = arith.subf %42, %43 : vector<8x1xf32>
    %45 = arith.addf %33, %38 : vector<8x1xf32>
    %46 = arith.divf %44, %45 : vector<8x1xf32>
    %cst_20 = arith.constant 0.000000e+00 : f32
    %47 = vector.broadcast %cst_20 : f32 to vector<8x1xf32>
    %48 = arith.subf %47, %46 : vector<8x1xf32>
    %cst_21 = arith.constant 1.000000e+00 : f32
    %49 = vector.broadcast %cst_21 : f32 to vector<8x1xf32>
    %50 = arith.subf %49, %38 : vector<8x1xf32>
    %51 = arith.mulf %48, %50 : vector<8x1xf32>
    %52 = tpu.iota {dimensions = array<i32: 1>} : vector<8x2xi32>
    %c0_i32 = arith.constant 0 : i32
    %53 = vector.broadcast %c0_i32 : i32 to vector<8x2xi32>
    %54 = arith.cmpi eq, %52, %53 : vector<8x2xi32>
    %55 = vector.shape_cast %51 : vector<8x1xf32> to vector<8x1xf32>
    %56 = vector.broadcast %55 : vector<8x1xf32> to vector<8x2xf32>
    %57 = vector.shape_cast %38 : vector<8x1xf32> to vector<8x1xf32>
    %58 = vector.broadcast %57 : vector<8x1xf32> to vector<8x2xf32>
    %59 = arith.select %54, %56, %58 : vector<8x2xi1>, vector<8x2xf32>
    %c0_22 = arith.constant 0 : index
    %c0_23 = arith.constant 0 : index
    %60 = vector.load %arg5[%c0_22, %c0_23] : memref<8x2xf32, #tpu.memory_space<vmem>>, vector<8x2xf32>
    tpu.vector_store %arg5[%c0_22, %c0_23], %59 {strides = array<i32>} : memref<8x2xf32, #tpu.memory_space<vmem>>, vector<8x2xf32>,
    return
  }
  func.func @transform_0(%arg0: i32) -> (i32, i32) {
    %c0_i32 = arith.constant 0 : i32
    %c0_i32_0 = arith.constant 0 : i32
    return %arg0, %c0_i32 : i32, i32
  }
  func.func @transform_1(%arg0: i32) -> (i32, i32) {
    %c0_i32 = arith.constant 0 : i32
    %c0_i32_0 = arith.constant 0 : i32
    return %arg0, %c0_i32 : i32, i32
  }
  func.func @transform_2(%arg0: i32) -> (i32, i32) {
    %c0_i32 = arith.constant 0 : i32
    %c0_i32_0 = arith.constant 0 : i32
    %c0_i32_1 = arith.constant 0 : i32
    return %c0_i32, %c0_i32_0 : i32, i32
  }
  func.func @transform_3(%arg0: i32) -> (i32, i32) {
    %c0_i32 = arith.constant 0 : i32
    %c0_i32_0 = arith.constant 0 : i32
    %c0_i32_1 = arith.constant 0 : i32
    return %c0_i32, %c0_i32_0 : i32, i32
  }
  func.func @transform_4(%arg0: i32) -> (i32, i32) {
    %c0_i32 = arith.constant 0 : i32
    %c0_i32_0 = arith.constant 0 : i32
    return %arg0, %c0_i32 : i32, i32
  }
}

</mosaic_0001>

<llo_original>
// kernel: tpu_custom_call.1
$region0: #{tpu_custom_call.1}
  #allocation0 [shape = 'u32[]', space=smem, size = 0x4, offset = 0x4, fixed_abs, tag = 'smem constant byte address 0x4 - core index']
  #allocation1 [shape = 'u32[72,128]{1,0:T(1,128)}', space=vmem, size = 0x9000, scoped, tag = 'internal scratch']
  %s0 = inlined_call_operand.vmem [shape: f32[24,32], index: 0, kind: input, shape index: {}]
  %s1 = inlined_call_operand.vmem [shape: s32[24,1], index: 1, kind: input, shape index: {}]
  %s2 = inlined_call_operand.vmem [shape: f32[32,24], index: 2, kind: input, shape index: {}]
  %s3 = inlined_call_operand.vmem [shape: s32[1,24], index: 3, kind: input, shape index: {}]
  %s4 = inlined_call_operand.vmem [shape: f32[24,2], index: 4, kind: output, shape index: {}]
  %s5 = sld [smem:[#allocation0]]
  $region49: #{tpu_custom_call.1} parent=0
    _
  %s7 = ssub.s32 1, %s5
  %s8 = scalar_select 0, %s7, %s5
  loop: start=0, step=1, limit=5
  $region2: #{tpu_custom_call.1} parent=0 // loop_pre_header
    _
  $region3: #{tpu_custom_call.1} parent=0 // loop_header
    %s10 = sphi 0, %s14
    %p11 = scmp.ge.s32.totalorder %s10, 5
    %s20 = sphi 0, %s22
    %s23 = sphi 0, %s20
    %s24 = sphi 0, %s23
    %s40 = sphi 0, %s24
    %s46 = sphi 0, %s48
    %s49 = sphi 0, %s46
    %s50 = sphi 0, %s49
    %s66 = sphi 0, %s50
    %s70 = sphi 0, %s70
    %s72 = sphi 0, %s70
    %s73 = sphi 0, %s72
    %s87 = sphi 0, %s73
    %s91 = sphi 0, %s91
    %s93 = sphi 0, %s91
    %s94 = sphi 0, %s93
    %s108 = sphi 0, %s94
    %s114 = sphi 0, %s116
    %s117 = sphi 0, %s114
    %s118 = sphi 0, %s117
    %s134 = sphi 0, %s118
  $region4: #{tpu_custom_call.1} parent=0 // loop_header_branch
    %13 = sbr.rel (%p11) target = $region8
  $region5: #{tpu_custom_call.1} parent=0 // loop_body
    %s15 = ssub.s32 %s10, 1
    %s16 = ssub.s32 %s10, 2
    %s17 = sadd.s32 %s10, 1
    %s18 = ssub.s32 %s10, %s17
    %p19 = scmp.eq.s32.totalorder %s18, 0
    %s21 = sadd.s32 %s20, 1
    %s22 = scalar_select %p19, %s20, %s21
    %p25 = pneg %p19
    %p26 = scmp.eq.s32.totalorder %s10, 2
    %p27 = por %p25, %p26
    %p28 = scmp.ne.s32.totalorder %s20, %s23
    %p29 = scmp.eq.s32.totalorder %s10, 0
    %p30 = por %p28, %p29
    %p31 = scmp.ne.s32.totalorder %s20, %s23
    %p32 = scmp.eq.s32.totalorder %s15, 2
    %p33 = por %p31, %p32
    %p34 = scmp.ne.s32.totalorder %s23, %s24
    %p35 = scmp.eq.s32.totalorder %s15, 0
    %p36 = por %p34, %p35
    %p37 = scmp.ne.s32.totalorder %s23, %s24
    %p38 = scmp.eq.s32.totalorder %s16, 2
    %p39 = por %p37, %p38
    %p41 = scmp.ne.s32.totalorder %s24, %s40
    %p42 = scmp.eq.s32.totalorder %s16, 0
    %p43 = por %p41, %p42
    %s44 = ssub.s32 %s10, %s17
    %p45 = scmp.eq.s32.totalorder %s44, 0
    %s47 = sadd.s32 %s46, 1
    %s48 = scalar_select %p45, %s46, %s47
    %p51 = pneg %p45
    %p52 = scmp.eq.s32.totalorder %s10, 2
    %p53 = por %p51, %p52
    %p54 = scmp.ne.s32.totalorder %s46, %s49
    %p55 = scmp.eq.s32.totalorder %s10, 0
    %p56 = por %p54, %p55
    %p57 = scmp.ne.s32.totalorder %s46, %s49
    %p58 = scmp.eq.s32.totalorder %s15, 2
    %p59 = por %p57, %p58
    %p60 = scmp.ne.s32.totalorder %s49, %s50
    %p61 = scmp.eq.s32.totalorder %s15, 0
    %p62 = por %p60, %p61
    %p63 = scmp.ne.s32.totalorder %s49, %s50
    %p64 = scmp.eq.s32.totalorder %s16, 2
    %p65 = por %p63, %p64
    %p67 = scmp.ne.s32.totalorder %s50, %s66
    %p68 = scmp.eq.s32.totalorder %s16, 0
    %p69 = por %p67, %p68
    %s71 = sadd.s32 %s70, 1
    %p74 = scmp.eq.s32.totalorder %s10, 2
    %p75 = scmp.ne.s32.totalorder %s70, %s72
    %p76 = scmp.eq.s32.totalorder %s10, 0
    %p77 = por %p75, %p76
    %p78 = scmp.ne.s32.totalorder %s70, %s72
    %p79 = scmp.eq.s32.totalorder %s15, 2
    %p80 = por %p78, %p79
    %p81 = scmp.ne.s32.totalorder %s72, %s73
    %p82 = scmp.eq.s32.totalorder %s15, 0
    %p83 = por %p81, %p82
    %p84 = scmp.ne.s32.totalorder %s72, %s73
    %p85 = scmp.eq.s32.totalorder %s16, 2
    %p86 = por %p84, %p85
    %p88 = scmp.ne.s32.totalorder %s73, %s87
    %p89 = scmp.eq.s32.totalorder %s16, 0
    %p90 = por %p88, %p89
    %s92 = sadd.s32 %s91, 1
    %p95 = scmp.eq.s32.totalorder %s10, 2
    %p96 = scmp.ne.s32.totalorder %s91, %s93
    %p97 = scmp.eq.s32.totalorder %s10, 0
    %p98 = por %p96, %p97
    %p99 = scmp.ne.s32.totalorder %s91, %s93
    %p100 = scmp.eq.s32.totalorder %s15, 2
    %p101 = por %p99, %p100
    %p102 = scmp.ne.s32.totalorder %s93, %s94
    %p103 = scmp.eq.s32.totalorder %s15, 0
    %p104 = por %p102, %p103
    %p105 = scmp.ne.s32.totalorder %s93, %s94
    %p106 = scmp.eq.s32.totalorder %s16, 2
    %p107 = por %p105, %p106
    %p109 = scmp.ne.s32.totalorder %s94, %s108
    %p110 = scmp.eq.s32.totalorder %s16, 0
    %p111 = por %p109, %p110
    %s112 = ssub.s32 %s10, %s17
    %p113 = scmp.eq.s32.totalorder %s112, 0
    %s115 = sadd.s32 %s114, 1
    %s116 = scalar_select %p113, %s114, %s115
    %p119 = pneg %p113
    %p120 = scmp.eq.s32.totalorder %s10, 2
    %p121 = por %p119, %p120
    %p122 = scmp.ne.s32.totalorder %s114, %s117
    %p123 = scmp.eq.s32.totalorder %s10, 0
    %p124 = por %p122, %p123
    %p125 = scmp.ne.s32.totalorder %s114, %s117
    %p126 = scmp.eq.s32.totalorder %s15, 2
    %p127 = por %p125, %p126
    %p128 = scmp.ne.s32.totalorder %s117, %s118
    %p129 = scmp.eq.s32.totalorder %s15, 0
    %p130 = por %p128, %p129
    %p131 = scmp.ne.s32.totalorder %s117, %s118
    %p132 = scmp.eq.s32.totalorder %s16, 2
    %p133 = por %p131, %p132
    %p135 = scmp.ne.s32.totalorder %s118, %s134
    %p136 = scmp.eq.s32.totalorder %s16, 0
    %p137 = por %p135, %p136
    %p138 = scmp.le.s32.totalorder 1, %s10
    %p139 = scmp.lt.s32.totalorder %s10, 4
    %p140 = pnand %p138, %p139
    %p141 = pneg %p140
    // Predicated region
    $region9: #{tpu_custom_call.1} parent=5 // pred_check
      _
    $region10: #{tpu_custom_call.1} parent=5 // pred_check_branch
      %143 = sbr.rel (%p140) target = $region12
    $region11: #{tpu_custom_call.1} parent=5 // pred_region
      %s144 = ssub.s32 %s10, 1
      // Predicated region
      $region13: #{tpu_custom_call.1} parent=11 // pred_check
        %p145 = pneg %p83
      $region14: #{tpu_custom_call.1} parent=11 // pred_check_branch
        %147 = sbr.rel (%p145) target = $region16
      $region15: #{tpu_custom_call.1} parent=11 // pred_region
        _
      $region16: #{tpu_custom_call.1} parent=11 // pred_fallthru
        _
      // Predicated region
      $region17: #{tpu_custom_call.1} parent=11 // pred_check
        %p148 = pneg %p104
      $region18: #{tpu_custom_call.1} parent=11 // pred_check_branch
        %150 = sbr.rel (%p148) target = $region20
      $region19: #{tpu_custom_call.1} parent=11 // pred_region
        _
      $region20: #{tpu_custom_call.1} parent=11 // pred_fallthru
        _
    $region12: #{tpu_custom_call.1} parent=5 // pred_fallthru
      _
    %p151 = scmp.lt.s32.totalorder %s10, 3
    // Predicated region
    $region21: #{tpu_custom_call.1} parent=5 // pred_check
      %p152 = pneg %p151
    $region22: #{tpu_custom_call.1} parent=5 // pred_check_branch
      %154 = sbr.rel (%p152) target = $region24
    $region23: #{tpu_custom_call.1} parent=5 // pred_region
      // Predicated region
      $region25: #{tpu_custom_call.1} parent=23 // pred_check
        %p155 = pneg %p30
      $region26: #{tpu_custom_call.1} parent=23 // pred_check_branch
        %157 = sbr.rel (%p155) target = $region28
      $region27: #{tpu_custom_call.1} parent=23 // pred_region
        %p158 = scmp.lt.s32.totalorder %s10, 2
        %s159 = scalar_select %p158, %s10, 2
        %s160 = smul.addr %s159, 8
        %s161 = scalar_lea.vmem %s0, %s160
      $region28: #{tpu_custom_call.1} parent=23 // pred_fallthru
        _
      // Predicated region
      $region29: #{tpu_custom_call.1} parent=23 // pred_check
        %p162 = pneg %p56
      $region30: #{tpu_custom_call.1} parent=23 // pred_check_branch
        %164 = sbr.rel (%p162) target = $region32
      $region31: #{tpu_custom_call.1} parent=23 // pred_region
        %p165 = scmp.lt.s32.totalorder %s10, 2
        %s166 = scalar_select %p165, %s10, 2
        %s167 = smul.addr %s166, 8
        %s168 = scalar_lea.vmem %s1, %s167
      $region32: #{tpu_custom_call.1} parent=23 // pred_fallthru
        _
    $region24: #{tpu_custom_call.1} parent=5 // pred_fallthru
      _
    %p169 = scmp.le.s32.totalorder 1, %s10
    %p170 = scmp.lt.s32.totalorder %s10, 4
    %p171 = pnand %p169, %p170
    %p172 = pneg %p171
    // Predicated region
    $region33: #{tpu_custom_call.1} parent=5 // pred_check
      _
    $region34: #{tpu_custom_call.1} parent=5 // pred_check_branch
      %174 = sbr.rel (%p171) target = $region36
    $region35: #{tpu_custom_call.1} parent=5 // pred_region
      %s175 = ssub.s32 %s10, 1
      %p176 = scmp.lt.s32.totalorder %s15, 2
      %s177 = scalar_select %p176, %s15, 2
      %s178 = smul.addr %s177, 8
      %s179 = scalar_lea.vmem %s0, %s178
      %p180 = pneg %p36
      %p181 = pneg %p33
      %p182 = scmp.lt.s32.totalorder %s15, 2
      %s183 = scalar_select %p182, %s15, 2
      %s184 = smul.addr %s183, 8
      %s185 = scalar_lea.vmem %s1, %s184
      %p186 = pneg %p62
      %p187 = pneg %p59
      %p188 = pneg %p83
      %p189 = pneg %p80
      %p190 = pneg %p104
      %p191 = pneg %p101
      %p192 = pneg %p130
      %p193 = pneg %p127
      %p194 = scmp.lt.s32.totalorder %s15, 2
      %s195 = scalar_select %p194, %s15, 2
      %s196 = smul.addr %s195, 8
      %s197 = scalar_lea.vmem %s4, %s196
      %p198 = scmp.lt.s32.totalorder %s15, 2
      %s199 = scalar_select %p198, %s15, 2
      %s200 = smul.addr %s199, 8
      %s201 = scalar_lea.vmem %s0, %s200
      %p202 = scmp.lt.s32.totalorder %s15, 2
      %s203 = scalar_select %p202, %s15, 2
      %s204 = smul.addr %s203, 8
      %s205 = scalar_lea.vmem %s1, %s204
      %p206 = scmp.lt.s32.totalorder %s15, 2
      %s207 = scalar_select %p206, %s15, 2
      %s208 = smul.addr %s207, 8
      %s209 = scalar_lea.vmem %s4, %s208
      %v210 = vld [vmem:[%s201] sm:$0xff]
      %v211 = vld [vmem:[%s2] sm:$0xff]
      %v212 = vld [vmem:[%s2 + $0x8] sm:$0xff]
      %v213 = vld [vmem:[%s2 + $0x10] sm:$0xff]
      %v214 = vld [vmem:[%s2 + $0x18] sm:$0xff]
      %v215 = vld [vmem:[%s205] sm:$0xff]
      %v216 = vld [vmem:[%s3] sm:$0x1]
      %vm217 = vcmask 261120
      %v219 = vsel %vm217, %v210, 0
      %221 = vmatpush.msra.mxu0 0.0
      %222 = vmatpush.msra.mxu0 0.0
      %223 = vmatpush.msra.mxu0 0.0
      %224 = vmatpush.msra.mxu0 0.0
      %225 = vmatpush.msra.mxu0 0.0
      %226 = vmatpush.msra.mxu0 0.0
      %227 = vmatpush.msra.mxu0 0.0
      %228 = vmatpush.msra.mxu0 0.0
      %229 = vmatpush.msra.mxu0 0.0
      %230 = vmatpush.msra.mxu0 0.0
      %231 = vmatpush.msra.mxu0 0.0
      %232 = vmatpush.msra.mxu0 0.0
      %233 = vmatpush.msra.mxu0 %v214
      %234 = vmatpush.msra.mxu0 %v213
      %235 = vmatpush.msra.mxu0 %v212
      %236 = vmatpush.msra.mxu0 %v211
      %237 = vmatmul.f32.gmra.mxu0 %v219
      %v238 = vpop.f32.mrf.mxu0
      %v239 = vadd.f32 0.0, %v238
      %240 = vdwg.mxu0
      %s241 = smul.u32 %s15, 8
      %v242 = vlaneseq
      %v243 = vshrl.u32 %v242, 7
      %v244 = vstv %s241
      %v245 = vadd.s32 %v243, %v244
      %v246 = vlaneseq
      %v247 = vand.u32 %v246, 127
      %vm248 = vcmp.eq.s32.totalorder %v247, %v245
      %249 = vset.pattern.permute.xlu0 0
      %250 = vperm.xlu0 %249, %v215
      %v251 = vpop.permute.xlu0 %250
      %v252 = vperm.slane %v216, 0
      %vm253 = vcmp.eq.s32.totalorder %v251, %v252
      %vm254 = vmxor %vm248, 1
      %vm255 = vmand %vm253, %vm254
      %vm256 = vcmask 195584
      %v257 = vsel %vm256, %v239, -inf
      %258 = vmax.xlane.f32.xlu0 %v257
      %v259 = vpop.xlane.xlu0 %258
      %v260 = vsub.f32 %v239, %v259
      %v261 = vmul.f32 %v260, 1.442695
      %v262 = vpow.pop %v261
      %v263 = vsel %vm248, 0.0, %v262
      %v264 = vsel %vm256, %v263, 0.0
      %265 = vadd.xlane.f32.xlu0 %v264
      %v266 = vpop.xlane.xlu0 %265
      %v267 = vadd.f32 %v266, 1e-20
      %v268 = vlog2.pop %v267
      %v269 = vmul.f32 %v268, 0.6931472
      %v270 = vsel %vm255, 1.0, 0.0
      %v271 = vsel %vm256, %v270, 0.0
      %272 = vadd.xlane.f32.xlu0 %v271
      %v273 = vpop.xlane.xlu0 %272
      %vm274 = vcmp.eq.f32.partialorder %v273, 0.0
      %v275 = vsel %vm274, 1.0, 0.0
      %v276 = vsel %vm255, %v260, 0.0
      %v277 = vsel %vm256, %v276, 0.0
      %278 = vadd.xlane.f32.xlu0 %v277
      %v279 = vpop.xlane.xlu0 %278
      %v280 = vmul.f32 %v273, %v269
      %v281 = vsub.f32 %v279, %v280
      %v282 = vadd.f32 %v273, %v275
      %v283 = vrcp.pop %v282
      %v284 = vmul.f32 %v282, %v283
      %v285 = vsub.f32 1.0, %v284
      %v286 = vmul.f32 %v283, %v285
      %v287 = vadd.f32 %v283, %v286
      %vm288 = vweird.f32 %v282
      %vm289 = vweird.f32 %v283
      %vm290 = vmor %vm288, %vm289
      %v291 = vsel %vm290, %v283, %v287
      %v292 = vand.u32 2147483647, %v282
      %vm293 = vcmp.eq.f32.partialorder %v292, 8.507059e+37
      %v294 = vand.u32 %v282, 2147483648
      %v295 = vor.u32 1.1754944e-38, %v294
      %v296 = vsel %vm293, %v295, %v291
      %v297 = vmul.f32 %v281, %v296
      %v298 = vsub.f32 0.0, %v297
      %v299 = vsub.f32 1.0, %v275
      %v300 = vmul.f32 %v298, %v299
      %vm301 = vcmp.eq.s32.totalorder %v247, 0
      %v302 = vsel %vm301, %v300, %v275
      %vm303 = vcmask 15360
      %304 = vst.msk [vmem:[%s209] sm:$0xff] %vm303, %v302
      %p305 = scmp.lt.s32.totalorder %s15, 2
      %s306 = scalar_select %p305, %s15, 2
      %s307 = smul.addr %s306, 8
      %s308 = scalar_lea.vmem %s4, %s307
      // Predicated region
      $region37: #{tpu_custom_call.1} parent=35 // pred_check
        %p309 = pneg %p127
      $region38: #{tpu_custom_call.1} parent=35 // pred_check_branch
        %311 = sbr.rel (%p309) target = $region40
      $region39: #{tpu_custom_call.1} parent=35 // pred_region
        _
      $region40: #{tpu_custom_call.1} parent=35 // pred_fallthru
        _
    $region36: #{tpu_custom_call.1} parent=5 // pred_fallthru
      _
    %p312 = scmp.le.s32.totalorder 2, %s10
    // Predicated region
    $region41: #{tpu_custom_call.1} parent=5 // pred_check
      %p313 = pneg %p312
    $region42: #{tpu_custom_call.1} parent=5 // pred_check_branch
      %315 = sbr.rel (%p313) target = $region44
    $region43: #{tpu_custom_call.1} parent=5 // pred_region
      %s316 = ssub.s32 %s10, 2
      // Predicated region
      $region45: #{tpu_custom_call.1} parent=43 // pred_check
        %p317 = pneg %p133
      $region46: #{tpu_custom_call.1} parent=43 // pred_check_branch
        %319 = sbr.rel (%p317) target = $region48
      $region47: #{tpu_custom_call.1} parent=43 // pred_region
        %p320 = scmp.lt.s32.totalorder %s16, 2
        %s321 = scalar_select %p320, %s16, 2
        %s322 = smul.addr %s321, 8
        %s323 = scalar_lea.vmem %s4, %s322
      $region48: #{tpu_custom_call.1} parent=43 // pred_fallthru
        _
    $region44: #{tpu_custom_call.1} parent=5 // pred_fallthru
      _
  $region6: #{tpu_custom_call.1} parent=0 // loop_footer
    %s14 = sadd.s32 1, %s10
  $region7: #{tpu_custom_call.1} parent=0 // loop_footer_branch
    %9 = sbr.rel target = $region3
  $region8: #{tpu_custom_call.1} parent=0 // loop_exit
    _

</llo_original>
